<compile_context>
chip_gen: v6e
topology: v6e:2x2x1
jax: 0.10.0
libtpu: 0.0.40
codegen_flags: <defaults>
</compile_context>

<pallas_src>
import math

import jax
import jax.numpy as jnp
from jax.experimental import pallas as pl
from jax.experimental.pallas import tpu as pltpu


def _round_up(x, m):
    return ((x + m - 1) // m) * m


def _vmem_capacity_bytes():
    try:
        return int(pltpu.get_tpu_info().vmem_capacity_bytes)
    except Exception:
        return 64 * 2 ** 20  # conservative fallback (v7x per-TC VMEM)


def _choose_tile_m(M, tile_m_max, min_grid=4):
    """Pick (tile_m, grid_m, Mp): balanced tiles, prefer exact divisors of M, >=min_grid tiles."""
    tile_m_max = max(16, (tile_m_max // 16) * 16)
    min_tiles = pl.cdiv(M, tile_m_max)
    want_tiles = max(min_tiles, min(min_grid, pl.cdiv(M, 16)))
    target = max(16, min(tile_m_max, pl.cdiv(M, want_tiles)))
    # Prefer an exact divisor of M (multiple of 16) near the target: no M padding, so the
    # kernel output needs no post-slice copy when N is also unpadded.
    if M % 16 == 0:
        t = (target // 16) * 16
        lo = max(16, target // 2)
        while t >= lo:
            if M % t == 0:
                return t, M // t, M
            t -= 16
    tile_m = _round_up(target, 16)
    Mp = _round_up(M, tile_m)
    return tile_m, Mp // tile_m, Mp


def _patch_embed_kernel(x_ref, w_ref, b_ref, o_ref):
    # x_ref: (tile_m, Kp) bf16; w_ref: (Kp, Np) bf16 (VMEM-resident);
    # b_ref: (1, Np) f32;      o_ref: (tile_m, Np) out dtype.
    acc = jnp.dot(x_ref[...], w_ref[...], preferred_element_type=jnp.float32)
    o_ref[...] = (acc + b_ref[...]).astype(o_ref.dtype)


def patch_embeddings(x, weight, bias, patch_size, *, out_dtype=None):
    """x: (B, C, H, W), weight: (hidden, C, P, P), bias: (hidden,).

    Returns (B, num_patches, hidden) == Conv2d(k=s=P)(x).flatten(2).transpose(1, 2).
    """
    B, C, H, W = x.shape
    hidden = weight.shape[0]
    P = patch_size
    Hp, Wp = H // P, W // P
    num_patches = Hp * Wp
    out_dtype = x.dtype if out_dtype is None else out_dtype

    # nn.Conv2d(stride=P) semantics: trailing rows/cols not filling a full patch are dropped.
    x = x[:, :, : Hp * P, : Wp * P]

    M = B * num_patches
    K = C * P * P
    N = hidden
    Kp = _round_up(K, 128)   # lane-dense LHS / weight rows
    Np = _round_up(N, 128)   # lane-dense output / weight cols

    # --- generation-aware VMEM budget -> tile_m ---
    out_itemsize = jnp.dtype(out_dtype).itemsize
    per_row = 2 * Kp * 2 + 2 * Np * out_itemsize        # double-buffered LHS (bf16) + out tiles
    fixed = 2 * Kp * Np * 2 + 2 * Np * 4                # resident weight (bf16) + bias (f32)
    cap = int(_vmem_capacity_bytes() * 0.75)            # headroom for Mosaic internal scratch
    tile_budget = cap // 2                              # tiles use ~half the budget
    tile_m_max = max(64, min(2048, ((tile_budget - fixed) // max(per_row, 1) // 16) * 16))
    tile_m, grid_m, Mp = _choose_tile_m(M, tile_m_max, min_grid=4)
    vmem_needed = fixed + tile_m * per_row
    vmem_limit = int(min(cap, max(vmem_needed + vmem_needed // 4, 32 * 2 ** 20)))

    # --- single fused producer pass: cast -> patch reorder -> (optional) pad ---
    # Casting first lets XLA fuse convert+reshape+transpose into one HBM pass writing bf16.
    patches = x.astype(jnp.bfloat16)
    patches = patches.reshape(B, C, Hp, P, Wp, P).transpose(0, 2, 4, 1, 3, 5)
    patches = patches.reshape(M, K)                      # (M, K), K order = (c, ph, pw)
    if Mp != M or Kp != K:
        patches = jnp.pad(patches, ((0, Mp - M), (0, Kp - K)))

    # conv weight (hidden, C, P, P) -> (K, N) so that matmul == conv; bf16 MXU feed.
    w_mat = weight.reshape(hidden, K).T.astype(jnp.bfloat16)
    if Kp != K or Np != N:
        w_mat = jnp.pad(w_mat, ((0, Kp - K), (0, Np - N)))
    b_mat = bias.astype(jnp.float32).reshape(1, N)
    if Np != N:
        b_mat = jnp.pad(b_mat, ((0, 0), (0, Np - N)))

    out_p = pl.pallas_call(
        _patch_embed_kernel,
        out_shape=jax.ShapeDtypeStruct((Mp, Np), out_dtype),
        grid=(grid_m,),
        in_specs=[
            pl.BlockSpec((tile_m, Kp), lambda i: (i, 0)),
            pl.BlockSpec((Kp, Np), lambda i: (0, 0)),   # weight: same block every step
            pl.BlockSpec((1, Np), lambda i: (0, 0)),    # bias:   same block every step
        ],
        out_specs=pl.BlockSpec((tile_m, Np), lambda i: (i, 0)),
        compiler_params=pltpu.CompilerParams(
            dimension_semantics=("parallel",),          # independent M tiles -> 2 TCs on v7x
            vmem_limit_bytes=vmem_limit,
        ),
    )(patches, w_mat, b_mat)

    # No-op when no padding was introduced (common ViT case: K,N lane-aligned, tile_m | M).
    out = out_p if (Mp == M and Np == N) else out_p[:M, :N]
    return out.reshape(B, num_patches, hidden)


if __name__ == "__main__":
    # Small config consistent with the module.
    config = dict(image_size=16, patch_size=4, num_channels=4, hidden_size=32)
    B = 2
    C = config["num_channels"]
    H = W = config["image_size"]
    P = config["patch_size"]
    hidden = config["hidden_size"]

    key = jax.random.PRNGKey(0)
    kx, kw, kb = jax.random.split(key, 3)

    x = jax.random.normal(kx, (B, C, H, W), dtype=jnp.float32)

    # Deterministic init mimicking nn.Conv2d default (uniform +/- 1/sqrt(fan_in)).
    fan_in = C * P * P
    bound = 1.0 / math.sqrt(fan_in)
    weight = jax.random.uniform(kw, (hidden, C, P, P), minval=-bound, maxval=bound,
                                dtype=jnp.float32)
    bias = jax.random.uniform(kb, (hidden,), minval=-bound, maxval=bound,
                              dtype=jnp.float32)

    out = patch_embeddings(x, weight, bias, P)
    out = jax.block_until_ready(out)

    # Reference check against lax conv (same semantics as nn.Conv2d stride=kernel).
    ref = jax.lax.conv_general_dilated(
        x, weight, window_strides=(P, P), padding="VALID",
        dimension_numbers=("NCHW", "OIHW", "NCHW"))
    ref = ref + bias.reshape(1, hidden, 1, 1)
    ref = ref.reshape(B, hidden, -1).transpose(0, 2, 1)   # flatten(2).transpose(1,2)

    assert out.shape == (B, (H // P) * (W // P), hidden)
    # bf16 operands (f32 accumulation) -> loosened tolerance vs f32 reference.
    assert jnp.allclose(out, ref, atol=3e-2, rtol=3e-2), float(
        jnp.max(jnp.abs(out - ref)))

    print("KERNEL_OK")
</pallas_src>

<mosaic_0001>
module attributes {stable_mosaic.version = 11 : i64} {
  func.func @_patch_embed_kernel(%arg0: i32, %arg1: memref<16x128xbf16, #tpu.memory_space<vmem>>, %arg2: memref<128x128xbf16, #tpu.memory_space<vmem>>, %arg3: memref<1x128xf32, #tpu.memory_space<vmem>>, %arg4: memref<16x128xf32, #tpu.memory_space<vmem>>) attributes {dimension_semantics = [#tpu.dimension_semantics<parallel>], iteration_bounds = array<i64: 2>, scalar_prefetch = 0 : i64, scratch_operands = 0 : i64, tpu.core_type = #tpu.core_type<tc>, window_params = [{transform_indices = @transform_0, window_bounds = array<i64: 16, 128>}, {pipeline_mode = #tpu.pipeline_mode<synchronous>, transform_indices = @transform_1, window_bounds = array<i64: 128, 128>}, {pipeline_mode = #tpu.pipeline_mode<synchronous>, transform_indices = @transform_2, window_bounds = array<i64: 1, 128>}, {transform_indices = @transform_3, window_bounds = array<i64: 16, 128>}]} {
    %c0 = arith.constant 0 : index
    %c0_0 = arith.constant 0 : index
    %0 = vector.load %arg1[%c0, %c0_0] : memref<16x128xbf16, #tpu.memory_space<vmem>>, vector<16x128xbf16>
    %c0_1 = arith.constant 0 : index
    %c0_2 = arith.constant 0 : index
    %1 = vector.load %arg2[%c0_1, %c0_2] : memref<128x128xbf16, #tpu.memory_space<vmem>>, vector<128x128xbf16>
    %cst = arith.constant dense<0.000000e+00> : vector<16x128xf32>
    %2 = tpu.matmul %0, %1, %cst {dimension_numbers = #tpu.dot_dimension_numbers<[1], [0], [0], [1], [0, 0, 1, 1], [], []>} : vector<16x128xbf16>, vector<128x128xbf16>, vector<16x128xf32> -> vector<16x128xf32>
    %c0_3 = arith.constant 0 : index
    %c0_4 = arith.constant 0 : index
    %3 = vector.load %arg3[%c0_3, %c0_4] : memref<1x128xf32, #tpu.memory_space<vmem>>, vector<1x128xf32>
    %4 = vector.broadcast %3 : vector<1x128xf32> to vector<16x128xf32>
    %5 = arith.addf %2, %4 : vector<16x128xf32>
    %c0_5 = arith.constant 0 : index
    %c0_6 = arith.constant 0 : index
    %6 = vector.load %arg4[%c0_5, %c0_6] : memref<16x128xf32, #tpu.memory_space<vmem>>, vector<16x128xf32>
    tpu.vector_store %arg4[%c0_5, %c0_6], %5 {strides = array<i32>} : memref<16x128xf32, #tpu.memory_space<vmem>>, vector<16x128xf32>,
    return
  }
  func.func @transform_0(%arg0: i32) -> (i32, i32) {
    %c0_i32 = arith.constant 0 : i32
    %c0_i32_0 = arith.constant 0 : i32
    return %arg0, %c0_i32 : i32, i32
  }
  func.func @transform_1(%arg0: i32) -> (i32, i32) {
    %c0_i32 = arith.constant 0 : i32
    %c0_i32_0 = arith.constant 0 : i32
    %c0_i32_1 = arith.constant 0 : i32
    return %c0_i32, %c0_i32_0 : i32, i32
  }
  func.func @transform_2(%arg0: i32) -> (i32, i32) {
    %c0_i32 = arith.constant 0 : i32
    %c0_i32_0 = arith.constant 0 : i32
    %c0_i32_1 = arith.constant 0 : i32
    return %c0_i32, %c0_i32_0 : i32, i32
  }
  func.func @transform_3(%arg0: i32) -> (i32, i32) {
    %c0_i32 = arith.constant 0 : i32
    %c0_i32_0 = arith.constant 0 : i32
    return %arg0, %c0_i32 : i32, i32
  }
}

</mosaic_0001>

<llo_original>
// kernel: tpu_custom_call.1
$region0: #{tpu_custom_call.1}
  #allocation0 [shape = 'u32[]', space=smem, size = 0x4, offset = 0x4, fixed_abs, tag = 'smem constant byte address 0x4 - core index']
  #allocation1 [shape = 'u32[144,128]{1,0:T(1,128)}', space=vmem, size = 0x12000, scoped, tag = 'internal scratch']
  %s0 = inlined_call_operand.hbm [shape: bf16[32,128], index: 0, kind: input, shape index: {}]
  %s1 = inlined_call_operand.hbm [shape: bf16[128,128], index: 1, kind: input, shape index: {}]
  %s2 = inlined_call_operand.vmem [shape: f32[1,128], index: 2, kind: input, shape index: {}]
  %s3 = inlined_call_operand.hbm [shape: f32[32,128], index: 3, kind: output, shape index: {}]
  %s4 = sld [smem:[#allocation0]]
  $region53: #{tpu_custom_call.1} parent=0
    _
  %s6 = ssub.s32 1, %s4
  %s7 = scalar_select 0, %s6, %s4
  $region1: #{tpu_custom_call.1} parent=0
    #allocation2 [shape = 'u8[8192]{0}', space=vmem, size = 0x2000, scoped, tag = 'input window, operand 0']
    #allocation3 [shape = 's32[2]{0}', space=sflag, size = 0x8, scoped, tag = 'scoped memory for tpu_custom_call.1']
    #allocation4 [shape = 's32[2]{0}', space=sflag, size = 0x8, scoped, tag = 'scoped memory for tpu_custom_call.1']
    #allocation5 [shape = 'u8[32768]{0}', space=vmem, size = 0x8000, scoped, tag = 'input window, operand 1, single buffered']
    #allocation6 [shape = 's32[1]{0}', space=sflag, size = 0x4, scoped, tag = 'scoped memory for tpu_custom_call.1']
    #allocation7 [shape = 'u8[16384]{0}', space=vmem, size = 0x4000, scoped, tag = 'output window, operand 0']
    %8 = vsyncpa [#allocation3], 0
    %s9 = scalar_lea.sflag [#allocation3], 1
    %10 = vsyncpa %s9, 0
    %11 = vsyncpa [#allocation6], 0
    %12 = vsyncpa [#allocation4], 0
    %s13 = scalar_lea.sflag [#allocation4], 1
    %14 = vsyncpa %s13, 0
    loop: start=0, step=1, limit=4
    $region2: #{tpu_custom_call.1} parent=1 // loop_pre_header
      _
    $region3: #{tpu_custom_call.1} parent=1 // loop_header
      %s16 = sphi 0, %s20
      %p17 = scmp.ge.s32.totalorder %s16, 4
      %s26 = sphi 0, %s28
      %s29 = sphi 0, %s26
      %s30 = sphi 0, %s29
      %s46 = sphi 0, %s30
      %s50 = sphi 0, %s50
      %s52 = sphi 0, %s50
      %s53 = sphi 0, %s52
      %s67 = sphi 0, %s53
      %s71 = sphi 0, %s71
      %s73 = sphi 0, %s71
      %s74 = sphi 0, %s73
      %s88 = sphi 0, %s74
      %s94 = sphi 0, %s96
      %s97 = sphi 0, %s94
      %s98 = sphi 0, %s97
      %s114 = sphi 0, %s98
    $region4: #{tpu_custom_call.1} parent=1 // loop_header_branch
      %19 = sbr.rel (%p17) target = $region8
    $region5: #{tpu_custom_call.1} parent=1 // loop_body
      %s21 = ssub.s32 %s16, 1
      %s22 = ssub.s32 %s16, 2
      %s23 = sadd.s32 %s16, 1
      %s24 = ssub.s32 %s16, %s23
      %p25 = scmp.eq.s32.totalorder %s24, 0
      %s27 = sadd.s32 %s26, 1
      %s28 = scalar_select %p25, %s26, %s27
      %p31 = pneg %p25
      %p32 = scmp.eq.s32.totalorder %s16, 1
      %p33 = por %p31, %p32
      %p34 = scmp.ne.s32.totalorder %s26, %s29
      %p35 = scmp.eq.s32.totalorder %s16, 0
      %p36 = por %p34, %p35
      %p37 = scmp.ne.s32.totalorder %s26, %s29
      %p38 = scmp.eq.s32.totalorder %s21, 1
      %p39 = por %p37, %p38
      %p40 = scmp.ne.s32.totalorder %s29, %s30
      %p41 = scmp.eq.s32.totalorder %s21, 0
      %p42 = por %p40, %p41
      %p43 = scmp.ne.s32.totalorder %s29, %s30
      %p44 = scmp.eq.s32.totalorder %s22, 1
      %p45 = por %p43, %p44
      %p47 = scmp.ne.s32.totalorder %s30, %s46
      %p48 = scmp.eq.s32.totalorder %s22, 0
      %p49 = por %p47, %p48
      %s51 = sadd.s32 %s50, 1
      %p54 = scmp.eq.s32.totalorder %s16, 1
      %p55 = scmp.ne.s32.totalorder %s50, %s52
      %p56 = scmp.eq.s32.totalorder %s16, 0
      %p57 = por %p55, %p56
      %p58 = scmp.ne.s32.totalorder %s50, %s52
      %p59 = scmp.eq.s32.totalorder %s21, 1
      %p60 = por %p58, %p59
      %p61 = scmp.ne.s32.totalorder %s52, %s53
      %p62 = scmp.eq.s32.totalorder %s21, 0
      %p63 = por %p61, %p62
      %p64 = scmp.ne.s32.totalorder %s52, %s53
      %p65 = scmp.eq.s32.totalorder %s22, 1
      %p66 = por %p64, %p65
      %p68 = scmp.ne.s32.totalorder %s53, %s67
      %p69 = scmp.eq.s32.totalorder %s22, 0
      %p70 = por %p68, %p69
      %s72 = sadd.s32 %s71, 1
      %p75 = scmp.eq.s32.totalorder %s16, 1
      %p76 = scmp.ne.s32.totalorder %s71, %s73
      %p77 = scmp.eq.s32.totalorder %s16, 0
      %p78 = por %p76, %p77
      %p79 = scmp.ne.s32.totalorder %s71, %s73
      %p80 = scmp.eq.s32.totalorder %s21, 1
      %p81 = por %p79, %p80
      %p82 = scmp.ne.s32.totalorder %s73, %s74
      %p83 = scmp.eq.s32.totalorder %s21, 0
      %p84 = por %p82, %p83
      %p85 = scmp.ne.s32.totalorder %s73, %s74
      %p86 = scmp.eq.s32.totalorder %s22, 1
      %p87 = por %p85, %p86
      %p89 = scmp.ne.s32.totalorder %s74, %s88
      %p90 = scmp.eq.s32.totalorder %s22, 0
      %p91 = por %p89, %p90
      %s92 = ssub.s32 %s16, %s23
      %p93 = scmp.eq.s32.totalorder %s92, 0
      %s95 = sadd.s32 %s94, 1
      %s96 = scalar_select %p93, %s94, %s95
      %p99 = pneg %p93
      %p100 = scmp.eq.s32.totalorder %s16, 1
      %p101 = por %p99, %p100
      %p102 = scmp.ne.s32.totalorder %s94, %s97
      %p103 = scmp.eq.s32.totalorder %s16, 0
      %p104 = por %p102, %p103
      %p105 = scmp.ne.s32.totalorder %s94, %s97
      %p106 = scmp.eq.s32.totalorder %s21, 1
      %p107 = por %p105, %p106
      %p108 = scmp.ne.s32.totalorder %s97, %s98
      %p109 = scmp.eq.s32.totalorder %s21, 0
      %p110 = por %p108, %p109
      %p111 = scmp.ne.s32.totalorder %s97, %s98
      %p112 = scmp.eq.s32.totalorder %s22, 1
      %p113 = por %p111, %p112
      %p115 = scmp.ne.s32.totalorder %s98, %s114
      %p116 = scmp.eq.s32.totalorder %s22, 0
      %p117 = por %p115, %p116
      %p118 = scmp.le.s32.totalorder 1, %s16
      %p119 = scmp.lt.s32.totalorder %s16, 3
      %p120 = pnand %p118, %p119
      %p121 = pneg %p120
      // Predicated region
      $region9: #{tpu_custom_call.1} parent=5 // pred_check
        _
      $region10: #{tpu_custom_call.1} parent=5 // pred_check_branch
        %123 = sbr.rel (%p120) target = $region12
      $region11: #{tpu_custom_call.1} parent=5 // pred_region
        %s124 = ssub.s32 %s16, 1
        // Predicated region
        $region13: #{tpu_custom_call.1} parent=11 // pred_check
          %p125 = pneg %p63
        $region14: #{tpu_custom_call.1} parent=11 // pred_check_branch
          %127 = sbr.rel (%p125) target = $region16
        $region15: #{tpu_custom_call.1} parent=11 // pred_region
          %s129 = ssub.s32 1024, 1024
          %130 = vsyncadd [#allocation6], %s129
          %s131 = sshll.u32 [#allocation5], 4
          %s132 = int_to_ptr.vmem [resolvable:$true] %s131
          %137 = dma.hbm_to_vmem [thread:$0]  %s1, 1024, %s132, [#allocation6], 64, 64, 4
        $region16: #{tpu_custom_call.1} parent=11 // pred_fallthru
          _
        // Predicated region
        $region17: #{tpu_custom_call.1} parent=11 // pred_check
          %p138 = pneg %p84
        $region18: #{tpu_custom_call.1} parent=11 // pred_check_branch
          %140 = sbr.rel (%p138) target = $region20
        $region19: #{tpu_custom_call.1} parent=11 // pred_region
          _
        $region20: #{tpu_custom_call.1} parent=11 // pred_fallthru
          _
      $region12: #{tpu_custom_call.1} parent=5 // pred_fallthru
        _
      %p141 = scmp.lt.s32.totalorder %s16, 2
      // Predicated region
      $region21: #{tpu_custom_call.1} parent=5 // pred_check
        %p142 = pneg %p141
      $region22: #{tpu_custom_call.1} parent=5 // pred_check_branch
        %144 = sbr.rel (%p142) target = $region24
      $region23: #{tpu_custom_call.1} parent=5 // pred_region
        // Predicated region
        $region25: #{tpu_custom_call.1} parent=23 // pred_check
          %p145 = pneg %p36
        $region26: #{tpu_custom_call.1} parent=23 // pred_check_branch
          %147 = sbr.rel (%p145) target = $region28
        $region27: #{tpu_custom_call.1} parent=23 // pred_region
          %s148 = sand.u32 %s26, 1
          %s149 = scalar_lea.sflag [#allocation3], %s148
          %s150 = sand.u32 %s26, 1
          %s151 = smul.addr %s150, 8
          %s152 = scalar_lea.vmem [#allocation2], %s151
          %s153 = smul.u32 2, %s16
          %s155 = ssub.s32 128, 128
          %156 = vsyncadd %s149, %s155
          %s157 = smul.addr %s153, 64
          %s158 = scalar_lea.hbm %s0, %s157
          %s159 = sshll.u32 %s152, 4
          %s160 = int_to_ptr.vmem [resolvable:$true] %s159
          %165 = dma.hbm_to_vmem [thread:$0]  %s158, 128, %s160, %s149, 64, 64, 4
        $region28: #{tpu_custom_call.1} parent=23 // pred_fallthru
          _
      $region24: #{tpu_custom_call.1} parent=5 // pred_fallthru
        _
      %p166 = scmp.le.s32.totalorder 1, %s16
      %p167 = scmp.lt.s32.totalorder %s16, 3
      %p168 = pnand %p166, %p167
      %p169 = pneg %p168
      // Predicated region
      $region29: #{tpu_custom_call.1} parent=5 // pred_check
        _
      $region30: #{tpu_custom_call.1} parent=5 // pred_check_branch
        %171 = sbr.rel (%p168) target = $region32
      $region31: #{tpu_custom_call.1} parent=5 // pred_region
        %s172 = ssub.s32 %s16, 1
        %s173 = sand.u32 %s29, 1
        %s174 = scalar_lea.sflag [#allocation3], %s173
        %s175 = sand.u32 %s29, 1
        %s176 = smul.addr %s175, 8
        %s177 = scalar_lea.vmem [#allocation2], %s176
        // Predicated region
        $region33: #{tpu_custom_call.1} parent=31 // pred_check
          %p178 = pneg %p42
        $region34: #{tpu_custom_call.1} parent=31 // pred_check_branch
          %180 = sbr.rel (%p178) target = $region36
        $region35: #{tpu_custom_call.1} parent=31 // pred_region
          %181 = dma.done %s174, 128
        $region36: #{tpu_custom_call.1} parent=31 // pred_fallthru
          _
        // Predicated region
        $region37: #{tpu_custom_call.1} parent=31 // pred_check
          %p182 = pneg %p63
        $region38: #{tpu_custom_call.1} parent=31 // pred_check_branch
          %184 = sbr.rel (%p182) target = $region40
        $region39: #{tpu_custom_call.1} parent=31 // pred_region
          %185 = dma.done [#allocation6], 1024
        $region40: #{tpu_custom_call.1} parent=31 // pred_fallthru
          _
        %s186 = sand.u32 %s29, 1
        %s187 = scalar_lea.sflag [#allocation3], %s186
        %s188 = sand.u32 %s29, 1
        %s189 = smul.addr %s188, 8
        %s190 = scalar_lea.vmem [#allocation2], %s189
        %p191 = pneg %p42
        %p192 = pneg %p39
        %p193 = pneg %p63
        %p194 = pneg %p60
        %p195 = pneg %p84
        %p196 = pneg %p81
        %p197 = pneg %p110
        %p198 = pneg %p107
        %s199 = sand.u32 %s97, 1
        %s200 = scalar_lea.sflag [#allocation4], %s199
        %s201 = sand.u32 %s97, 1
        %s202 = smul.addr %s201, 16
        %s203 = scalar_lea.vmem [#allocation7], %s202
        %s204 = smul.u32 2, %s21
        %s205 = smul.u32 2, %s21
        %v207 = vld [vmem:[%s177] sm:$0xf]
        %v208 = vld [vmem:[%s177 + $0x4] sm:$0xf]
        %v209 = vld [vmem:[#allocation5] sm:$0xf]
        %v210 = vld [vmem:[#allocation5 + $0x4] sm:$0xf]
        %v211 = vld [vmem:[#allocation5 + $0x8] sm:$0xf]
        %v212 = vld [vmem:[#allocation5 + $0xc] sm:$0xf]
        %v213 = vld [vmem:[#allocation5 + $0x10] sm:$0xf]
        %v214 = vld [vmem:[#allocation5 + $0x14] sm:$0xf]
        %v215 = vld [vmem:[#allocation5 + $0x18] sm:$0xf]
        %v216 = vld [vmem:[#allocation5 + $0x1c] sm:$0xf]
        %v217 = vld [vmem:[#allocation5 + $0x20] sm:$0xf]
        %v218 = vld [vmem:[#allocation5 + $0x24] sm:$0xf]
        %v219 = vld [vmem:[#allocation5 + $0x28] sm:$0xf]
        %v220 = vld [vmem:[#allocation5 + $0x2c] sm:$0xf]
        %v221 = vld [vmem:[#allocation5 + $0x30] sm:$0xf]
        %v222 = vld [vmem:[#allocation5 + $0x34] sm:$0xf]
        %v223 = vld [vmem:[#allocation5 + $0x38] sm:$0xf]
        %v224 = vld [vmem:[#allocation5 + $0x3c] sm:$0xf]
        %v225 = vld [vmem:[%s2] sm:$0x1]
        %v227 = vlaneseq
        %v228 = vshrl.u32 %v227, 7
        %v229 = vsub.s32 0, %v228
        %v230 = vrot.slane %v225, %v229
        %v234 = vunpack.c.l.b16 %v207
        %v235 = vunpack.c.l.b16 %v208
        %v236 = vpack.c.b16 %v235, %v234
        %v254 = vunpack.c.l.b16 %v209
        %v255 = vunpack.c.l.b16 %v210
        %v256 = vunpack.c.l.b16 %v211
        %v257 = vunpack.c.l.b16 %v212
        %v258 = vunpack.c.l.b16 %v213
        %v259 = vunpack.c.l.b16 %v214
        %v260 = vunpack.c.l.b16 %v215
        %v261 = vunpack.c.l.b16 %v216
        %v262 = vunpack.c.l.b16 %v217
        %v263 = vunpack.c.l.b16 %v218
        %v264 = vunpack.c.l.b16 %v219
        %v265 = vunpack.c.l.b16 %v220
        %v266 = vunpack.c.l.b16 %v221
        %v267 = vunpack.c.l.b16 %v222
        %v268 = vunpack.c.l.b16 %v223
        %v269 = vunpack.c.l.b16 %v224
        %v270 = vpack.c.b16 %v255, %v254
        %v271 = vpack.c.b16 %v257, %v256
        %v272 = vpack.c.b16 %v259, %v258
        %v273 = vpack.c.b16 %v261, %v260
        %v274 = vpack.c.b16 %v263, %v262
        %v275 = vpack.c.b16 %v265, %v264
        %v276 = vpack.c.b16 %v267, %v266
        %v277 = vpack.c.b16 %v269, %v268
        %286 = vmatprep.subr.bf16.mxu0 0
        %287 = vmatpush1.bf16.msra.mxu0 %v277
        %288 = vmatprep.subr.bf16.mxu0 0
        %289 = vmatpush1.bf16.msra.mxu0 %v276
        %290 = vmatprep.subr.bf16.mxu0 0
        %291 = vmatpush1.bf16.msra.mxu0 %v275
        %292 = vmatprep.subr.bf16.mxu0 0
        %293 = vmatpush1.bf16.msra.mxu0 %v274
        %294 = vmatprep.subr.bf16.mxu0 0
        %295 = vmatpush1.bf16.msra.mxu0 %v273
        %296 = vmatprep.subr.bf16.mxu0 0
        %297 = vmatpush1.bf16.msra.mxu0 %v272
        %298 = vmatprep.subr.bf16.mxu0 0
        %299 = vmatpush1.bf16.msra.mxu0 %v271
        %300 = vmatprep.subr.bf16.mxu0 0
        %301 = vmatpush1.bf16.msra.mxu0 %v270
        %302 = vmatprep.subr.bf16.mxu0 0
        %303 = vmatpush2.bf16.msra.mxu0 0
        %304 = vmatprep.subr.bf16.mxu0 0
        %305 = vmatpush2.bf16.msra.mxu0 0
        %306 = vmatprep.subr.bf16.mxu0 0
        %307 = vmatpush2.bf16.msra.mxu0 0
        %308 = vmatprep.subr.bf16.mxu0 0
        %309 = vmatpush2.bf16.msra.mxu0 0
        %310 = vmatprep.subr.bf16.mxu0 0
        %311 = vmatpush2.bf16.msra.mxu0 0
        %312 = vmatprep.subr.bf16.mxu0 0
        %313 = vmatpush2.bf16.msra.mxu0 0
        %314 = vmatprep.subr.bf16.mxu0 0
        %315 = vmatpush2.bf16.msra.mxu0 0
        %316 = vmatprep.subr.bf16.mxu0 0
        %317 = vmatpush2.bf16.msra.mxu0 0
        %318 = vmatprep.mubr.bf16.mxu0 0
        %319 = vmatmul.mubr.bf16.gmra.mxu0 %v236
        %v320 = vpop.f32.mrf.mxu0
        %v321 = vadd.f32 %v230, %v320
        %v322 = vpop.f32.mrf.mxu0
        %v323 = vpop.f32.mrf.mxu0
        %v324 = vadd.f32 %v230, %v323
        %v325 = vpop.f32.mrf.mxu0
        %326 = vdwg.mxu0
        %327 = vst [vmem:[%s203] sm:$0xff] %v321
        %328 = vst [vmem:[%s203 + $0x8] sm:$0xff] %v324
        %s329 = sand.u32 %s97, 1
        %s330 = scalar_lea.sflag [#allocation4], %s329
        %s331 = sand.u32 %s97, 1
        %s332 = smul.addr %s331, 16
        %s333 = scalar_lea.vmem [#allocation7], %s332
        // Predicated region
        $region41: #{tpu_custom_call.1} parent=31 // pred_check
          %p334 = pneg %p107
        $region42: #{tpu_custom_call.1} parent=31 // pred_check_branch
          %336 = sbr.rel (%p334) target = $region44
        $region43: #{tpu_custom_call.1} parent=31 // pred_region
          %s337 = smul.u32 2, %s21
          %s339 = ssub.s32 256, 256
          %340 = vsyncadd %s330, %s339
          %s341 = smul.addr %s337, 128
          %s342 = scalar_lea.hbm %s3, %s341
          %s343 = sshll.u32 %s333, 4
          %s344 = int_to_ptr.vmem [resolvable:$true] %s343
          %349 = dma.vmem_to_hbm [thread:$0]  %s344, 256, %s342, %s330, 128, 128, 8
        $region44: #{tpu_custom_call.1} parent=31 // pred_fallthru
          _
      $region32: #{tpu_custom_call.1} parent=5 // pred_fallthru
        _
      %p350 = scmp.le.s32.totalorder 2, %s16
      // Predicated region
      $region45: #{tpu_custom_call.1} parent=5 // pred_check
        %p351 = pneg %p350
      $region46: #{tpu_custom_call.1} parent=5 // pred_check_branch
        %353 = sbr.rel (%p351) target = $region48
      $region47: #{tpu_custom_call.1} parent=5 // pred_region
        %s354 = ssub.s32 %s16, 2
        // Predicated region
        $region49: #{tpu_custom_call.1} parent=47 // pred_check
          %p355 = pneg %p113
        $region50: #{tpu_custom_call.1} parent=47 // pred_check_branch
          %357 = sbr.rel (%p355) target = $region52
        $region51: #{tpu_custom_call.1} parent=47 // pred_region
          %s358 = sand.u32 %s98, 1
          %s359 = scalar_lea.sflag [#allocation4], %s358
          %s360 = sand.u32 %s98, 1
          %s361 = smul.addr %s360, 16
          %s362 = scalar_lea.vmem [#allocation7], %s361
          %363 = dma.done %s359, 256
        $region52: #{tpu_custom_call.1} parent=47 // pred_fallthru
          _
      $region48: #{tpu_custom_call.1} parent=5 // pred_fallthru
        _
    $region6: #{tpu_custom_call.1} parent=1 // loop_footer
      %s20 = sadd.s32 1, %s16
    $region7: #{tpu_custom_call.1} parent=1 // loop_footer_branch
      %15 = sbr.rel target = $region3
    $region8: #{tpu_custom_call.1} parent=1 // loop_exit
      _
    %364 = vsyncpa [#allocation3], 1
    %s365 = scalar_lea.sflag [#allocation3], 1
    %366 = vsyncpa %s365, 1
    %367 = vsyncpa [#allocation6], 1
    %368 = vsyncpa [#allocation4], 1
    %s369 = scalar_lea.sflag [#allocation4], 1
    %370 = vsyncpa %s369, 1

</llo_original>
